<compile_context>
chip_gen: v7x
topology: tpu7x:2x2x1
jax: 0.10.0
libtpu: 0.0.40
codegen_flags: <defaults>
</compile_context>

<pallas_src>
import functools

import jax
import jax.numpy as jnp
from jax.experimental import pallas as pl
from jax.experimental.pallas import tpu as pltpu


# ----------------------------------------------------------------------------
# Kernel: per batch-tile margin loss.
#   y_pred_ref : (TB, C) f32   predicted capsule lengths / class probs
#   y_true_ref : (TB, 1) i32   integer class labels
#   loss_ref   : (TB, 1) f32   per-sample loss
# ----------------------------------------------------------------------------
def _margin_loss_kernel(y_pred_ref, y_true_ref, loss_ref, *, m_pos, m_neg, lambda_):
    y = y_pred_ref[...]                                        # (TB, C)
    labels = y_true_ref[...]                                   # (TB, 1)

    # one-hot targets built in-register (lane index == class index); no HBM scatter.
    cls = jax.lax.broadcasted_iota(jnp.int32, y.shape, 1)      # (TB, C)
    t = (cls == labels).astype(jnp.float32)                    # (TB, C) one-hot

    pos = jnp.maximum(m_pos - y, 0.0)                          # clamp(m_pos - y, min=0)
    neg = jnp.maximum(y - m_neg, 0.0)                          # clamp(y - m_neg, min=0)
    per_class = t * (pos * pos) + lambda_ * (1.0 - t) * (neg * neg)

    loss_ref[...] = jnp.sum(per_class, axis=1, keepdims=True)  # (TB, 1), single store


# ----------------------------------------------------------------------------
# Wrapper: pads the batch to a tile multiple, runs the gridded pallas_call, and
# applies the optional 'mean' / 'sum' reduction (cheap, done in plain JAX).
# ----------------------------------------------------------------------------
def margin_loss(y_pred, y_true, reduction=None, *, m_pos=0.9, m_neg=0.1,
                lambda_=0.5, block_b=1024):
    y_pred = y_pred.astype(jnp.float32)
    B, C = y_pred.shape
    labels = y_true.reshape(B, 1).astype(jnp.int32)

    # Batch tile: full batch if small, otherwise `block_b` rows (multiple of 8 sublanes).
    tb = min(block_b, B)
    Bp = pl.cdiv(B, tb) * tb
    if Bp != B:
        y_pred = jnp.pad(y_pred, ((0, Bp - B), (0, 0)))
        # -1 never matches a class index -> padded rows contribute no pos term.
        labels = jnp.pad(labels, ((0, Bp - B), (0, 0)), constant_values=-1)

    kernel = functools.partial(_margin_loss_kernel, m_pos=float(m_pos),
                               m_neg=float(m_neg), lambda_=float(lambda_))

    losses = pl.pallas_call(
        kernel,
        out_shape=jax.ShapeDtypeStruct((Bp, 1), jnp.float32),
        grid_spec=pltpu.PrefetchScalarGridSpec(
            num_scalar_prefetch=0,
            grid=(Bp // tb,),
            in_specs=[pl.BlockSpec((tb, C), lambda i: (i, 0)),
                      pl.BlockSpec((tb, 1), lambda i: (i, 0))],
            out_specs=pl.BlockSpec((tb, 1), lambda i: (i, 0)),
        ),
        compiler_params=pltpu.CompilerParams(
            dimension_semantics=("parallel",),       # shard batch tiles across TCs (v7x)
            vmem_limit_bytes=64 * 1024 * 1024,       # safe on v7x (64 MiB VMEM), explicit on v5e
        ),
    )(y_pred, labels)

    losses = losses[:B, 0]
    if reduction == "mean":
        return losses.mean()
    if reduction == "sum":
        return losses.sum()
    return losses


# ----------------------------------------------------------------------------
# Pure-JAX reference (mirrors the PyTorch forward) for correctness checking.
# ----------------------------------------------------------------------------
def _margin_loss_ref(y_pred, y_true, m_pos=0.9, m_neg=0.1, lambda_=0.5):
    C = y_pred.shape[1]
    t = jax.nn.one_hot(y_true, C, dtype=jnp.float32)
    per = (t * jnp.maximum(m_pos - y_pred, 0.0) ** 2
           + lambda_ * (1.0 - t) * jnp.maximum(y_pred - m_neg, 0.0) ** 2)
    return jnp.sum(per, axis=1)


if __name__ == "__main__":
    key = jax.random.PRNGKey(0)
    kp, kt, kp2, kt2 = jax.random.split(key, 4)

    # Small case (matches the MNIST capsnet head: 10 classes), batch=2.
    B, C = 2, 10
    y_pred = jax.random.uniform(kp, (B, C), jnp.float32)          # capsule lengths in [0, 1)
    y_true = jax.random.randint(kt, (B,), 0, C, jnp.int32)

    losses = jax.jit(margin_loss)(y_pred, y_true)
    losses = jax.block_until_ready(losses)
    ref = _margin_loss_ref(y_pred, y_true)

    assert losses.shape == (B,), losses.shape
    assert bool(jnp.all(jnp.isfinite(losses)))
    assert bool(jnp.allclose(losses, ref, atol=1e-6, rtol=1e-6))

    # Larger, non-tile-aligned batch to exercise the gridded/pipelined + padded path.
    B2 = 4100
    y_pred2 = jax.random.uniform(kp2, (B2, C), jnp.float32)
    y_true2 = jax.random.randint(kt2, (B2,), 0, C, jnp.int32)

    losses2 = jax.jit(margin_loss)(y_pred2, y_true2)
    losses2 = jax.block_until_ready(losses2)
    ref2 = _margin_loss_ref(y_pred2, y_true2)

    assert losses2.shape == (B2,)
    assert bool(jnp.allclose(losses2, ref2, atol=1e-6, rtol=1e-6))

    print("KERNEL_OK")
</pallas_src>

<mosaic_0001>
module attributes {stable_mosaic.version = 11 : i64} {
  func.func @_margin_loss_kernel(%arg0: i32, %arg1: memref<2x10xf32, #tpu.memory_space<vmem>>, %arg2: memref<2x1xi32, #tpu.memory_space<vmem>>, %arg3: memref<2x1xf32, #tpu.memory_space<vmem>>) attributes {dimension_semantics = [#tpu.dimension_semantics<parallel>], iteration_bounds = array<i64: 1>, scalar_prefetch = 0 : i64, scratch_operands = 0 : i64, tpu.core_type = #tpu.core_type<tc>, window_params = [{transform_indices = @transform_0, window_bounds = array<i64: 2, 10>}, {transform_indices = @transform_1, window_bounds = array<i64: 2, 1>}, {transform_indices = @transform_2, window_bounds = array<i64: 2, 1>}]} {
    %c0 = arith.constant 0 : index
    %c0_0 = arith.constant 0 : index
    %0 = vector.load %arg1[%c0, %c0_0] : memref<2x10xf32, #tpu.memory_space<vmem>>, vector<2x10xf32>
    %c0_1 = arith.constant 0 : index
    %c0_2 = arith.constant 0 : index
    %1 = vector.load %arg2[%c0_1, %c0_2] : memref<2x1xi32, #tpu.memory_space<vmem>>, vector<2x1xi32>
    %2 = tpu.iota {dimensions = array<i32: 1>} : vector<2x10xi32>
    %3 = vector.broadcast %1 : vector<2x1xi32> to vector<2x10xi32>
    %4 = arith.cmpi eq, %2, %3 : vector<2x10xi32>
    %5 = arith.extui %4 : vector<2x10xi1> to vector<2x10xi32>
    %6 = arith.sitofp %5 : vector<2x10xi32> to vector<2x10xf32>
    %cst = arith.constant 0.899999976 : f32
    %7 = vector.broadcast %cst : f32 to vector<2x10xf32>
    %8 = arith.subf %7, %0 : vector<2x10xf32>
    %cst_3 = arith.constant 0.000000e+00 : f32
    %9 = vector.broadcast %cst_3 : f32 to vector<2x10xf32>
    %10 = arith.maximumf %8, %9 : vector<2x10xf32>
    %cst_4 = arith.constant 1.000000e-01 : f32
    %11 = vector.broadcast %cst_4 : f32 to vector<2x10xf32>
    %12 = arith.subf %0, %11 : vector<2x10xf32>
    %cst_5 = arith.constant 0.000000e+00 : f32
    %13 = vector.broadcast %cst_5 : f32 to vector<2x10xf32>
    %14 = arith.maximumf %12, %13 : vector<2x10xf32>
    %15 = arith.mulf %10, %10 : vector<2x10xf32>
    %16 = arith.mulf %6, %15 : vector<2x10xf32>
    %cst_6 = arith.constant 1.000000e+00 : f32
    %17 = vector.broadcast %cst_6 : f32 to vector<2x10xf32>
    %18 = arith.subf %17, %6 : vector<2x10xf32>
    %cst_7 = arith.constant 5.000000e-01 : f32
    %19 = vector.broadcast %cst_7 : f32 to vector<2x10xf32>
    %20 = arith.mulf %19, %18 : vector<2x10xf32>
    %21 = arith.mulf %14, %14 : vector<2x10xf32>
    %22 = arith.mulf %20, %21 : vector<2x10xf32>
    %23 = arith.addf %16, %22 : vector<2x10xf32>
    %cst_8 = arith.constant dense<0.000000e+00> : vector<2xf32>
    %24 = vector.multi_reduction <add>, %23, %cst_8 [1] : vector<2x10xf32> to vector<2xf32>
    %25 = vector.shape_cast %24 : vector<2xf32> to vector<2x1xf32>
    %c0_9 = arith.constant 0 : index
    %c0_10 = arith.constant 0 : index
    %26 = vector.load %arg3[%c0_9, %c0_10] : memref<2x1xf32, #tpu.memory_space<vmem>>, vector<2x1xf32>
    tpu.vector_store %arg3[%c0_9, %c0_10], %25 {strides = array<i32>} : memref<2x1xf32, #tpu.memory_space<vmem>>, vector<2x1xf32>,
    return
  }
  func.func @transform_0(%arg0: i32) -> (i32, i32) {
    %c0_i32 = arith.constant 0 : i32
    %c0_i32_0 = arith.constant 0 : i32
    return %arg0, %c0_i32 : i32, i32
  }
  func.func @transform_1(%arg0: i32) -> (i32, i32) {
    %c0_i32 = arith.constant 0 : i32
    %c0_i32_0 = arith.constant 0 : i32
    return %arg0, %c0_i32 : i32, i32
  }
  func.func @transform_2(%arg0: i32) -> (i32, i32) {
    %c0_i32 = arith.constant 0 : i32
    %c0_i32_0 = arith.constant 0 : i32
    return %arg0, %c0_i32 : i32, i32
  }
}

</mosaic_0001>

<llo_original>
// kernel: margin_loss.1
$region0: #{margin_loss.1}
  #allocation0 [shape = 'u32[]', space=smem, size = 0x4, offset = 0x4, fixed_abs, tag = 'smem constant byte address 0x4 - core index']
  #allocation1 [shape = 'u32[144,128]{1,0:T(1,128)}', space=vmem, size = 0x12000, scoped, tag = 'internal scratch']
  %s0 = inlined_call_operand.hbm [shape: f32[2,10], index: 0, kind: input, shape index: {}]
  %s1 = inlined_call_operand.hbm [shape: s32[2,1], index: 1, kind: input, shape index: {}]
  %s2 = inlined_call_operand.hbm [shape: f32[2,1], index: 2, kind: output, shape index: {}]
  %s3 = sld [smem:[#allocation0]]
  $region26: #{margin_loss.1} parent=0
    _
  %s5 = ssub.s32 1, %s3
  %s6 = scalar_select 0, %s5, %s3
  $region1: #{margin_loss.1} parent=0
    #allocation2 [shape = 'u8[1024]{0}', space=vmem, size = 0x400, scoped, tag = 'input window, operand 0, single buffered']
    #allocation3 [shape = 's32[1]{0}', space=sflag, size = 0x4, scoped, tag = 'scoped memory for margin_loss.1']
    #allocation4 [shape = 's32[1]{0}', space=sflag, size = 0x4, scoped, tag = 'scoped memory for margin_loss.1']
    #allocation5 [shape = 'u8[1024]{0}', space=vmem, size = 0x400, scoped, tag = 'input window, operand 1, single buffered']
    #allocation6 [shape = 's32[1]{0}', space=sflag, size = 0x4, scoped, tag = 'scoped memory for margin_loss.1']
    #allocation7 [shape = 'u8[1024]{0}', space=vmem, size = 0x400, scoped, tag = 'output window, operand 0, single buffered']
    %7 = vsyncpa [#allocation3], 0
    %8 = vsyncpa [#allocation6], 0
    %9 = vsyncpa [#allocation4], 0
    // Predicated region
    $region2: #{margin_loss.1} parent=1 // pred_check
      _
    $region3: #{margin_loss.1} parent=1 // pred_check_branch
      %11 = sbr.rel (0) target = $region5
    $region4: #{margin_loss.1} parent=1 // pred_region
      %s13 = ssub.s32 32, 32
      %14 = vsyncadd [#allocation3], %s13
      %s16 = sshll.u32 [#allocation2], 4
      %s17 = int_to_ptr.vmem [resolvable:$true] %s16
      %19 = dma.hbm_to_vmem [thread:$0]  %s0, 32, %s17, [#allocation3]
    $region5: #{margin_loss.1} parent=1 // pred_fallthru
      _
    // Predicated region
    $region6: #{margin_loss.1} parent=1 // pred_check
      _
    $region7: #{margin_loss.1} parent=1 // pred_check_branch
      %21 = sbr.rel (0) target = $region9
    $region8: #{margin_loss.1} parent=1 // pred_region
      %s23 = ssub.s32 32, 32
      %24 = vsyncadd [#allocation6], %s23
      %s26 = sshll.u32 [#allocation5], 4
      %s27 = int_to_ptr.vmem [resolvable:$true] %s26
      %29 = dma.hbm_to_vmem [thread:$0]  %s1, 32, %s27, [#allocation6]
    $region9: #{margin_loss.1} parent=1 // pred_fallthru
      _
    // Predicated region
    $region10: #{margin_loss.1} parent=1 // pred_check
      _
    $region11: #{margin_loss.1} parent=1 // pred_check_branch
      %31 = sbr.rel (0) target = $region13
    $region12: #{margin_loss.1} parent=1 // pred_region
      %32 = dma.done [#allocation3], 32
    $region13: #{margin_loss.1} parent=1 // pred_fallthru
      _
    // Predicated region
    $region14: #{margin_loss.1} parent=1 // pred_check
      _
    $region15: #{margin_loss.1} parent=1 // pred_check_branch
      %34 = sbr.rel (0) target = $region17
    $region16: #{margin_loss.1} parent=1 // pred_region
      %35 = dma.done [#allocation6], 32
    $region17: #{margin_loss.1} parent=1 // pred_fallthru
      _
    %v36 = vld [vmem:[#allocation2] sm:$0x3]
    %v37 = vld [vmem:[#allocation5] sm:$0x3]
    %v38 = vlaneseq
    %v39 = vand.u32 %v38, 127
    %40 = vset.pattern.permute.xlu0 0
    %41 = vperm.xlu0 %40, %v37
    %v42 = vpop.permute.xlu0 %41
    %vm43 = vcmp.eq.s32.totalorder %v39, %v42
    %v44 = vsel %vm43, 1, 0
    %v45 = vcvt.s32.f32 %v44
    %v46 = vsub.f32 0.9, %v36
    %v47 = vmax.f32 %v46, 0.0
    %v48 = vsub.f32 %v36, 0.1
    %v49 = vmax.f32 %v48, 0.0
    %v50 = vmul.f32 %v47, %v47
    %v51 = vmul.f32 %v45, %v50
    %v52 = vsub.f32 1.0, %v45
    %v53 = vmul.f32 %v52, 0.5
    %v54 = vmul.f32 %v49, %v49
    %v55 = vmul.f32 %v53, %v54
    %v56 = vadd.f32 %v51, %v55
    %vm57 = vcmask 74752
    %v58 = vsel %vm57, %v56, 0.0
    %59 = vadd.xlane.f32.xlu0 %v58
    %v60 = vpop.xlane.xlu0 %59
    %vm61 = vcmask 1024
    %62 = vst.msk [vmem:[#allocation7] sm:$0x3] %vm61, %v60
    // Predicated region
    $region18: #{margin_loss.1} parent=1 // pred_check
      _
    $region19: #{margin_loss.1} parent=1 // pred_check_branch
      %64 = sbr.rel (0) target = $region21
    $region20: #{margin_loss.1} parent=1 // pred_region
      %s66 = ssub.s32 32, 32
      %67 = vsyncadd [#allocation4], %s66
      %s69 = sshll.u32 [#allocation7], 4
      %s70 = int_to_ptr.vmem [resolvable:$true] %s69
      %72 = dma.vmem_to_hbm [thread:$0]  %s70, 32, %s2, [#allocation4]
    $region21: #{margin_loss.1} parent=1 // pred_fallthru
      _
    // Predicated region
    $region22: #{margin_loss.1} parent=1 // pred_check
      _
    $region23: #{margin_loss.1} parent=1 // pred_check_branch
      %74 = sbr.rel (0) target = $region25
    $region24: #{margin_loss.1} parent=1 // pred_region
      %75 = dma.done [#allocation4], 32
    $region25: #{margin_loss.1} parent=1 // pred_fallthru
      _
    %76 = vsyncpa [#allocation3], 1
    %77 = vsyncpa [#allocation6], 1
    %78 = vsyncpa [#allocation4], 1

</llo_original>
